<compile_context>
chip_gen: v7x
topology: tpu7x:2x2x1
jax: 0.10.0
libtpu: 0.0.40
codegen_flags: <defaults>
</compile_context>

<pallas_src>
import jax
import jax.numpy as jnp
import numpy as np
from jax.experimental import pallas as pl
from jax.experimental.pallas import tpu as pltpu


# ----------------------------------------------------------------------------
# Stage 1: per-pixel, per-class softmax error (classes on sublanes, pixels on
# lanes; lane-dense, O(C*N)).
# ----------------------------------------------------------------------------
def _error_kernel(logits_ref, labels_ref, err_ref):
    x = logits_ref[...].astype(jnp.float32)              # (C, T)
    lab = labels_ref[...]                                 # (1, T) int32
    num_classes = x.shape[0]

    # Softmax over the small, static class axis; manual unroll keeps a fixed
    # reduction order (each slice is a lane-dense (1, T) row).
    m = x[0:1, :]
    for c in range(1, num_classes):
        m = jnp.maximum(m, x[c:c + 1, :])
    e = jnp.exp(x - m)                                    # (C, T)
    denom = e[0:1, :]
    for c in range(1, num_classes):
        denom = denom + e[c:c + 1, :]
    probs = e * (1.0 / denom)                             # exact divide (parity)

    valid = lab != -1                                     # (1, T)
    cls = jax.lax.broadcasted_iota(jnp.int32, x.shape, 0)
    fg = (cls == lab).astype(jnp.float32)                 # label -1 never matches
    err = jnp.abs(fg - probs)
    # Ignored / padded pixels get error -1 (< any valid error in [0, 1]) so
    # they sort strictly last and contribute 0 through relu(err) in stage 2.
    err_ref[...] = jnp.where(valid, err, -1.0)


# ----------------------------------------------------------------------------
# Stage 2: O(N^2) precedence ranking + Lovasz gradient, tiled over
# (class, i_tile, j_tile) with the j reduction axis last.
# ----------------------------------------------------------------------------
def _lovasz_kernel(gts_ref, err_i_ref, err_j_ref, lab_i_ref, lab_j_ref,
                   out_ref, rankfg_acc):
    c = pl.program_id(0)
    i = pl.program_id(1)
    j = pl.program_id(2)
    n_j = pl.num_programs(2)
    tile_i = err_i_ref.shape[2]
    tile_j = err_j_ref.shape[1]

    @pl.when(j == 0)
    def _init():
        rankfg_acc[...] = jnp.zeros_like(rankfg_acc)

    err_i = err_i_ref[0]                                  # (1, tile_i) f32 row
    err_j = err_j_ref[0]                                  # (tile_j, 1) f32 col

    # Stable-sort tie-break via tiny 1-D global pixel indices (no 2-D iotas).
    gidx_j = j * tile_j + jax.lax.broadcasted_iota(jnp.int32, (tile_j, 1), 0)
    gidx_i = i * tile_i + jax.lax.broadcasted_iota(jnp.int32, (1, tile_i), 1)

    one_bf = jnp.ones((), jnp.bfloat16)
    zero_bf = jnp.zeros((), jnp.bfloat16)

    # prec[b, a] == 1 iff j-pixel b strictly precedes i-pixel a in the stable
    # descending error sort (ties broken by smaller global index first).
    cond = (err_j > err_i) | ((err_j == err_i) & (gidx_j < gidx_i))
    prec = jnp.where(cond, one_bf, zero_bf)               # (tile_j, tile_i) bf16

    # Both j-reductions in one MXU matmul: row 0 (ones) -> rank, row 1 (fg_j)
    # -> fg-before-me, rows 2..7 zero padding.  0/1 bf16 operands, f32 acc
    # (exact for n_pad < 2**24 pixels).
    row = jax.lax.broadcasted_iota(jnp.int32, (8, tile_j), 0)
    fg_j = jnp.where(lab_j_ref[...] == c, one_bf, zero_bf)        # (1, tile_j)
    u = jnp.where(row == 0, one_bf, jnp.where(row == 1, fg_j, zero_bf))
    rankfg_acc[...] += jnp.dot(u, prec,
                               preferred_element_type=jnp.float32)  # (8, tile_i)

    @pl.when(j == n_j - 1)
    def _finalize():
        gts = gts_ref[c].astype(jnp.float32)              # hoisted fg count
        rank = rankfg_acc[0:1, :]                         # (1, tile_i)
        fg_before = rankfg_acc[1:2, :]                    # (1, tile_i)
        fg_i = (lab_i_ref[...] == c).astype(jnp.float32)  # (1, tile_i)
        cum_fg = fg_before + fg_i                         # inclusive fg cumsum
        pos1 = rank + 1.0                                 # 1-based sorted position
        union = gts + pos1 - cum_fg                       # >= 1 everywhere
        jacc = 1.0 - (gts - cum_fg) / union
        union_prev = jnp.maximum(gts + rank - fg_before, 1.0)
        jacc_prev = 1.0 - (gts - fg_before) / union_prev
        grad = jacc - jacc_prev
        contrib = jnp.maximum(err_i, 0.0) * grad          # relu drops ignored/pad
        loss_tile = jnp.where(gts > 0.0, jnp.sum(contrib), 0.0)
        out_ref[...] = jnp.broadcast_to(loss_tile, (1, 1, 8, 128))


# ----------------------------------------------------------------------------
# Wrapper
# ----------------------------------------------------------------------------
def lovasz_softmax_loss(pred, label, *, tile_i=512, tile_j=1024, tile_p=2048):
    """pred: (B, C, H, W) float logits; label: (B, H, W) int, ignore index -1."""
    B, C, H, W = pred.shape
    N = B * H * W
    align = int(np.lcm.reduce([tile_i, tile_j, tile_p]))
    n_pad = ((N + align - 1) // align) * align
    assert n_pad < (1 << 24), "bf16 0/1 MXU ranking exact only below 2**24 pixels"
    n_i = n_pad // tile_i
    n_j = n_pad // tile_j

    # Class-major logits (C, N_pad); padded pixels labelled -1 behave exactly
    # like ignored pixels.
    logits_cn = jnp.transpose(pred, (1, 0, 2, 3)).reshape(C, N).astype(jnp.float32)
    logits_cn = jnp.pad(logits_cn, ((0, 0), (0, n_pad - N)))
    labels_1n = jnp.pad(label.reshape(1, N).astype(jnp.int32),
                        ((0, 0), (0, n_pad - N)), constant_values=-1)

    # ---- Stage 1: per-class errors (C, N_pad) ------------------------------
    err_cn = pl.pallas_call(
        _error_kernel,
        out_shape=jax.ShapeDtypeStruct((C, n_pad), jnp.float32),
        grid_spec=pltpu.PrefetchScalarGridSpec(
            num_scalar_prefetch=0,
            grid=(n_pad // tile_p,),
            in_specs=[pl.BlockSpec((C, tile_p), lambda p: (0, p)),
                      pl.BlockSpec((1, tile_p), lambda p: (0, p))],
            out_specs=pl.BlockSpec((C, tile_p), lambda p: (0, p)),
        ),
        compiler_params=pltpu.CompilerParams(dimension_semantics=("parallel",)),
    )(logits_cn, labels_1n)

    # Two free reshapes of the SAME error buffer (bitwise identical values):
    # row view for the i-blocks, trailing-unit-dim view so the j-blocks arrive
    # directly as (tile_j, 1) columns (no host transpose, no one-hot extract).
    err_row = err_cn.reshape(C, 1, n_pad)
    err_col = err_cn.reshape(C, n_pad, 1)

    # Per-class foreground counts, hoisted out of the O(N^2) loop (exact ints).
    class_ids = jnp.arange(C, dtype=jnp.int32)
    gts_i32 = jnp.sum((labels_1n == class_ids[:, None]).astype(jnp.int32), axis=1)

    # ---- Stage 2: O(N^2) ranking + Lovasz gradient --------------------------
    steps = C * n_i * n_j
    flops = int(16 * C * n_pad * n_pad)                    # compares + MXU MACs
    bytes_accessed = int(steps * (tile_i + tile_j) * 8 + C * n_i * 8 * 128 * 4)

    out = pl.pallas_call(
        _lovasz_kernel,
        out_shape=jax.ShapeDtypeStruct((C, n_i, 8, 128), jnp.float32),
        grid_spec=pltpu.PrefetchScalarGridSpec(
            num_scalar_prefetch=1,                         # gts[c] in SMEM
            grid=(C, n_i, n_j),                            # j (reduction) last
            in_specs=[
                pl.BlockSpec((1, 1, tile_i), lambda c, i, j, gts: (c, 0, i)),
                pl.BlockSpec((1, tile_j, 1), lambda c, i, j, gts: (c, j, 0)),
                pl.BlockSpec((1, tile_i), lambda c, i, j, gts: (0, i)),
                pl.BlockSpec((1, tile_j), lambda c, i, j, gts: (0, j)),
            ],
            out_specs=pl.BlockSpec((1, 1, 8, 128), lambda c, i, j, gts: (c, i, 0, 0)),
            scratch_shapes=[pltpu.VMEM((8, tile_i), jnp.float32)],
        ),
        compiler_params=pltpu.CompilerParams(
            dimension_semantics=("parallel", "parallel", "arbitrary")),
        cost_estimate=pl.CostEstimate(flops=flops, transcendentals=0,
                                      bytes_accessed=bytes_accessed),
    )(gts_i32, err_row, err_col, labels_1n, labels_1n)

    # Tiny epilogue: mean of per-class losses over present classes.
    loss_part = out[:, :, 0, 0]                            # (C, n_i)
    present = jnp.sum((gts_i32 > 0).astype(jnp.float32))
    return jnp.sum(loss_part) / jnp.maximum(present, 1.0)


# ----------------------------------------------------------------------------
# Reference (numpy) and self-test
# ----------------------------------------------------------------------------
def _reference_lovasz_softmax(pred, label, ignore=-1):
    """Pure numpy re-implementation of Berman's lovasz_softmax (per_image=False)."""
    probs = np.asarray(jax.nn.softmax(pred, axis=1), dtype=np.float64)
    labels = np.asarray(label)
    B, C, H, W = probs.shape
    p = probs.transpose(0, 2, 3, 1).reshape(-1, C)
    l = labels.reshape(-1)
    valid = l != ignore
    vp, vl = p[valid], l[valid]
    losses = []
    for c in range(C):
        fg = (vl == c).astype(np.float64)
        if fg.sum() == 0:
            continue
        errors = np.abs(fg - vp[:, c])
        order = np.argsort(-errors, kind="stable")
        e_s, fg_s = errors[order], fg[order]
        gts = fg_s.sum()
        inter = gts - np.cumsum(fg_s)
        union = gts + np.cumsum(1.0 - fg_s)
        jac = 1.0 - inter / union
        grad = jac.copy()
        grad[1:] = jac[1:] - jac[:-1]
        losses.append(float(np.dot(e_s, grad)))
    return float(np.mean(losses))


if __name__ == "__main__":
    key = jax.random.PRNGKey(0)
    B, C, H, W = 2, 4, 16, 16
    k1, k2, k3 = jax.random.split(key, 3)
    pred = jax.random.normal(k1, (B, C, H, W), dtype=jnp.float32)
    label = jax.random.randint(k2, (B, H, W), 0, C)
    ignore_mask = jax.random.uniform(k3, (B, H, W)) < 0.1
    label = jnp.where(ignore_mask, -1, label)   # exercise ignore=-1

    loss = lovasz_softmax_loss(pred, label)
    loss = jax.block_until_ready(loss)

    ref = _reference_lovasz_softmax(pred, label)
    assert abs(float(loss) - ref) < 1e-4, (float(loss), ref)
    print("KERNEL_OK")
</pallas_src>

<mosaic_0001>
module attributes {stable_mosaic.version = 11 : i64} {
  func.func @_error_kernel(%arg0: i32, %arg1: memref<4x2048xf32, #tpu.memory_space<vmem>>, %arg2: memref<1x2048xi32, #tpu.memory_space<vmem>>, %arg3: memref<4x2048xf32, #tpu.memory_space<vmem>>) attributes {dimension_semantics = [#tpu.dimension_semantics<parallel>], iteration_bounds = array<i64: 1>, scalar_prefetch = 0 : i64, scratch_operands = 0 : i64, tpu.core_type = #tpu.core_type<tc>, window_params = [{transform_indices = @transform_0, window_bounds = array<i64: 4, 2048>}, {transform_indices = @transform_1, window_bounds = array<i64: 1, 2048>}, {transform_indices = @transform_2, window_bounds = array<i64: 4, 2048>}]} {
    %c0 = arith.constant 0 : index
    %c0_0 = arith.constant 0 : index
    %0 = vector.load %arg1[%c0, %c0_0] : memref<4x2048xf32, #tpu.memory_space<vmem>>, vector<4x2048xf32>
    %c0_1 = arith.constant 0 : index
    %c0_2 = arith.constant 0 : index
    %1 = vector.load %arg2[%c0_1, %c0_2] : memref<1x2048xi32, #tpu.memory_space<vmem>>, vector<1x2048xi32>
    %2 = vector.extract_strided_slice %0 {offsets = [0, 0], sizes = [1, 2048], strides = [1, 1]} : vector<4x2048xf32> to vector<1x2048xf32>
    %3 = vector.extract_strided_slice %0 {offsets = [1, 0], sizes = [1, 2048], strides = [1, 1]} : vector<4x2048xf32> to vector<1x2048xf32>
    %4 = arith.maximumf %2, %3 : vector<1x2048xf32>
    %5 = vector.extract_strided_slice %0 {offsets = [2, 0], sizes = [1, 2048], strides = [1, 1]} : vector<4x2048xf32> to vector<1x2048xf32>
    %6 = arith.maximumf %4, %5 : vector<1x2048xf32>
    %7 = vector.extract_strided_slice %0 {offsets = [3, 0], sizes = [1, 2048], strides = [1, 1]} : vector<4x2048xf32> to vector<1x2048xf32>
    %8 = arith.maximumf %6, %7 : vector<1x2048xf32>
    %9 = vector.broadcast %8 : vector<1x2048xf32> to vector<4x2048xf32>
    %10 = arith.subf %0, %9 : vector<4x2048xf32>
    %11 = math.exp %10 : vector<4x2048xf32>
    %12 = vector.extract_strided_slice %11 {offsets = [0, 0], sizes = [1, 2048], strides = [1, 1]} : vector<4x2048xf32> to vector<1x2048xf32>
    %13 = vector.extract_strided_slice %11 {offsets = [1, 0], sizes = [1, 2048], strides = [1, 1]} : vector<4x2048xf32> to vector<1x2048xf32>
    %14 = arith.addf %12, %13 : vector<1x2048xf32>
    %15 = vector.extract_strided_slice %11 {offsets = [2, 0], sizes = [1, 2048], strides = [1, 1]} : vector<4x2048xf32> to vector<1x2048xf32>
    %16 = arith.addf %14, %15 : vector<1x2048xf32>
    %17 = vector.extract_strided_slice %11 {offsets = [3, 0], sizes = [1, 2048], strides = [1, 1]} : vector<4x2048xf32> to vector<1x2048xf32>
    %18 = arith.addf %16, %17 : vector<1x2048xf32>
    %cst = arith.constant 1.000000e+00 : f32
    %19 = vector.broadcast %cst : f32 to vector<1x2048xf32>
    %20 = arith.divf %19, %18 : vector<1x2048xf32>
    %21 = vector.broadcast %20 : vector<1x2048xf32> to vector<4x2048xf32>
    %22 = arith.mulf %11, %21 : vector<4x2048xf32>
    %c-1_i32 = arith.constant -1 : i32
    %23 = vector.broadcast %c-1_i32 : i32 to vector<1x2048xi32>
    %24 = arith.cmpi ne, %1, %23 : vector<1x2048xi32>
    %25 = tpu.iota {dimensions = array<i32: 0>} : vector<4x2048xi32>
    %26 = vector.broadcast %1 : vector<1x2048xi32> to vector<4x2048xi32>
    %27 = arith.cmpi eq, %25, %26 : vector<4x2048xi32>
    %28 = arith.extui %27 : vector<4x2048xi1> to vector<4x2048xi32>
    %29 = arith.sitofp %28 : vector<4x2048xi32> to vector<4x2048xf32>
    %30 = arith.subf %29, %22 : vector<4x2048xf32>
    %31 = math.absf %30 : vector<4x2048xf32>
    %cst_3 = arith.constant -1.000000e+00 : f32
    %32 = vector.shape_cast %24 : vector<1x2048xi1> to vector<1x2048xi1>
    %33 = vector.broadcast %32 : vector<1x2048xi1> to vector<4x2048xi1>
    %34 = vector.broadcast %cst_3 : f32 to vector<4x2048xf32>
    %35 = arith.select %33, %31, %34 : vector<4x2048xi1>, vector<4x2048xf32>
    %c0_4 = arith.constant 0 : index
    %c0_5 = arith.constant 0 : index
    %36 = vector.load %arg3[%c0_4, %c0_5] : memref<4x2048xf32, #tpu.memory_space<vmem>>, vector<4x2048xf32>
    tpu.vector_store %arg3[%c0_4, %c0_5], %35 {strides = array<i32>} : memref<4x2048xf32, #tpu.memory_space<vmem>>, vector<4x2048xf32>,
    return
  }
  func.func @transform_0(%arg0: i32) -> (i32, i32) {
    %c0_i32 = arith.constant 0 : i32
    %c0_i32_0 = arith.constant 0 : i32
    return %c0_i32, %arg0 : i32, i32
  }
  func.func @transform_1(%arg0: i32) -> (i32, i32) {
    %c0_i32 = arith.constant 0 : i32
    %c0_i32_0 = arith.constant 0 : i32
    return %c0_i32, %arg0 : i32, i32
  }
  func.func @transform_2(%arg0: i32) -> (i32, i32) {
    %c0_i32 = arith.constant 0 : i32
    %c0_i32_0 = arith.constant 0 : i32
    return %c0_i32, %arg0 : i32, i32
  }
}

</mosaic_0001>

<llo_original>
// kernel: tpu_custom_call.1
$region0: #{tpu_custom_call.1}
  #allocation0 [shape = 'u32[]', space=smem, size = 0x4, offset = 0x4, fixed_abs, tag = 'smem constant byte address 0x4 - core index']
  #allocation1 [shape = 'u32[144,128]{1,0:T(1,128)}', space=vmem, size = 0x12000, scoped, tag = 'internal scratch']
  %s0 = inlined_call_operand.hbm [shape: f32[4,2048], index: 0, kind: input, shape index: {}]
  %s1 = inlined_call_operand.hbm [shape: s32[1,2048], index: 1, kind: input, shape index: {}]
  %s2 = inlined_call_operand.hbm [shape: f32[4,2048], index: 2, kind: output, shape index: {}]
  %s3 = sld [smem:[#allocation0]]
  $region26: #{tpu_custom_call.1} parent=0
    _
  %s5 = ssub.s32 1, %s3
  %s6 = scalar_select 0, %s5, %s3
  $region1: #{tpu_custom_call.1} parent=0
    #allocation2 [shape = 'u8[32768]{0}', space=vmem, size = 0x8000, scoped, tag = 'input window, operand 0, single buffered']
    #allocation3 [shape = 's32[1]{0}', space=sflag, size = 0x4, scoped, tag = 'scoped memory for tpu_custom_call.1']
    #allocation4 [shape = 's32[1]{0}', space=sflag, size = 0x4, scoped, tag = 'scoped memory for tpu_custom_call.1']
    #allocation5 [shape = 'u8[8192]{0}', space=vmem, size = 0x2000, scoped, tag = 'input window, operand 1, single buffered']
    #allocation6 [shape = 's32[1]{0}', space=sflag, size = 0x4, scoped, tag = 'scoped memory for tpu_custom_call.1']
    #allocation7 [shape = 'u8[32768]{0}', space=vmem, size = 0x8000, scoped, tag = 'output window, operand 0, single buffered']
    %7 = vsyncpa [#allocation3], 0
    %8 = vsyncpa [#allocation6], 0
    %9 = vsyncpa [#allocation4], 0
    // Predicated region
    $region2: #{tpu_custom_call.1} parent=1 // pred_check
      _
    $region3: #{tpu_custom_call.1} parent=1 // pred_check_branch
      %11 = sbr.rel (0) target = $region5
    $region4: #{tpu_custom_call.1} parent=1 // pred_region
      %s13 = ssub.s32 1024, 1024
      %14 = vsyncadd [#allocation3], %s13
      %s16 = sshll.u32 [#allocation2], 4
      %s17 = int_to_ptr.vmem [resolvable:$true] %s16
      %19 = dma.hbm_to_vmem [thread:$0]  %s0, 1024, %s17, [#allocation3]
    $region5: #{tpu_custom_call.1} parent=1 // pred_fallthru
      _
    // Predicated region
    $region6: #{tpu_custom_call.1} parent=1 // pred_check
      _
    $region7: #{tpu_custom_call.1} parent=1 // pred_check_branch
      %21 = sbr.rel (0) target = $region9
    $region8: #{tpu_custom_call.1} parent=1 // pred_region
      %s23 = ssub.s32 256, 256
      %24 = vsyncadd [#allocation6], %s23
      %s26 = sshll.u32 [#allocation5], 4
      %s27 = int_to_ptr.vmem [resolvable:$true] %s26
      %29 = dma.hbm_to_vmem [thread:$0]  %s1, 256, %s27, [#allocation6]
    $region9: #{tpu_custom_call.1} parent=1 // pred_fallthru
      _
    // Predicated region
    $region10: #{tpu_custom_call.1} parent=1 // pred_check
      _
    $region11: #{tpu_custom_call.1} parent=1 // pred_check_branch
      %31 = sbr.rel (0) target = $region13
    $region12: #{tpu_custom_call.1} parent=1 // pred_region
      %32 = dma.done [#allocation3], 1024
    $region13: #{tpu_custom_call.1} parent=1 // pred_fallthru
      _
    // Predicated region
    $region14: #{tpu_custom_call.1} parent=1 // pred_check
      _
    $region15: #{tpu_custom_call.1} parent=1 // pred_check_branch
      %34 = sbr.rel (0) target = $region17
    $region16: #{tpu_custom_call.1} parent=1 // pred_region
      %35 = dma.done [#allocation6], 256
    $region17: #{tpu_custom_call.1} parent=1 // pred_fallthru
      _
    %v36 = vld [vmem:[#allocation2] sm:$0xff]
    %v37 = vld [vmem:[#allocation2 + $0x8] sm:$0xff]
    %v38 = vld [vmem:[#allocation2 + $0x10] sm:$0xff]
    %v39 = vld [vmem:[#allocation2 + $0x18] sm:$0xff]
    %v40 = vld [vmem:[#allocation2 + $0x20] sm:$0xff]
    %v41 = vld [vmem:[#allocation2 + $0x28] sm:$0xff]
    %v42 = vld [vmem:[#allocation2 + $0x30] sm:$0xff]
    %v43 = vld [vmem:[#allocation2 + $0x38] sm:$0xff]
    %v44 = vld [vmem:[#allocation5] sm:$0xff]
    %v45 = vld [vmem:[#allocation5 + $0x8] sm:$0xff]
    %v54 = vrot.slane %v36, 5
    %v55 = vrot.slane %v54, 4
    %v56 = vrot.slane %v37, 5
    %v57 = vrot.slane %v56, 4
    %v58 = vrot.slane %v38, 5
    %v59 = vrot.slane %v58, 4
    %v60 = vrot.slane %v39, 5
    %v61 = vrot.slane %v60, 4
    %v62 = vrot.slane %v40, 5
    %v63 = vrot.slane %v62, 4
    %v64 = vrot.slane %v41, 5
    %v65 = vrot.slane %v64, 4
    %v66 = vrot.slane %v42, 5
    %v67 = vrot.slane %v66, 4
    %v68 = vrot.slane %v43, 5
    %v69 = vrot.slane %v68, 4
    %v78 = vmax.f32 %v36, %v55
    %v79 = vmax.f32 %v37, %v57
    %v80 = vmax.f32 %v38, %v59
    %v81 = vmax.f32 %v39, %v61
    %v82 = vmax.f32 %v40, %v63
    %v83 = vmax.f32 %v41, %v65
    %v84 = vmax.f32 %v42, %v67
    %v85 = vmax.f32 %v43, %v69
    %v86 = vrot.slane %v36, 6
    %v87 = vrot.slane %v86, 4
    %v88 = vrot.slane %v37, 6
    %v89 = vrot.slane %v88, 4
    %v90 = vrot.slane %v38, 6
    %v91 = vrot.slane %v90, 4
    %v92 = vrot.slane %v39, 6
    %v93 = vrot.slane %v92, 4
    %v94 = vrot.slane %v40, 6
    %v95 = vrot.slane %v94, 4
    %v96 = vrot.slane %v41, 6
    %v97 = vrot.slane %v96, 4
    %v98 = vrot.slane %v42, 6
    %v99 = vrot.slane %v98, 4
    %v100 = vrot.slane %v43, 6
    %v101 = vrot.slane %v100, 4
    %v110 = vmax.f32 %v78, %v87
    %v111 = vmax.f32 %v79, %v89
    %v112 = vmax.f32 %v80, %v91
    %v113 = vmax.f32 %v81, %v93
    %v114 = vmax.f32 %v82, %v95
    %v115 = vmax.f32 %v83, %v97
    %v116 = vmax.f32 %v84, %v99
    %v117 = vmax.f32 %v85, %v101
    %v118 = vrot.slane %v36, 7
    %v119 = vrot.slane %v118, 4
    %v120 = vrot.slane %v37, 7
    %v121 = vrot.slane %v120, 4
    %v122 = vrot.slane %v38, 7
    %v123 = vrot.slane %v122, 4
    %v124 = vrot.slane %v39, 7
    %v125 = vrot.slane %v124, 4
    %v126 = vrot.slane %v40, 7
    %v127 = vrot.slane %v126, 4
    %v128 = vrot.slane %v41, 7
    %v129 = vrot.slane %v128, 4
    %v130 = vrot.slane %v42, 7
    %v131 = vrot.slane %v130, 4
    %v132 = vrot.slane %v43, 7
    %v133 = vrot.slane %v132, 4
    %v142 = vmax.f32 %v110, %v119
    %v143 = vmax.f32 %v111, %v121
    %v144 = vmax.f32 %v112, %v123
    %v145 = vmax.f32 %v113, %v125
    %v146 = vmax.f32 %v114, %v127
    %v147 = vmax.f32 %v115, %v129
    %v148 = vmax.f32 %v116, %v131
    %v149 = vmax.f32 %v117, %v133
    %v158 = vlaneseq
    %v159 = vshrl.u32 %v158, 7
    %v160 = vsub.s32 0, %v159
    %v161 = vrot.slane %v142, %v160
    %v162 = vlaneseq
    %v163 = vshrl.u32 %v162, 7
    %v164 = vsub.s32 4, %v163
    %v165 = vrot.slane %v142, %v164
    %v166 = vlaneseq
    %v167 = vshrl.u32 %v166, 7
    %v168 = vsub.s32 0, %v167
    %v169 = vrot.slane %v143, %v168
    %v170 = vlaneseq
    %v171 = vshrl.u32 %v170, 7
    %v172 = vsub.s32 4, %v171
    %v173 = vrot.slane %v143, %v172
    %v174 = vlaneseq
    %v175 = vshrl.u32 %v174, 7
    %v176 = vsub.s32 0, %v175
    %v177 = vrot.slane %v144, %v176
    %v178 = vlaneseq
    %v179 = vshrl.u32 %v178, 7
    %v180 = vsub.s32 4, %v179
    %v181 = vrot.slane %v144, %v180
    %v182 = vlaneseq
    %v183 = vshrl.u32 %v182, 7
    %v184 = vsub.s32 0, %v183
    %v185 = vrot.slane %v145, %v184
    %v186 = vlaneseq
    %v187 = vshrl.u32 %v186, 7
    %v188 = vsub.s32 4, %v187
    %v189 = vrot.slane %v145, %v188
    %v190 = vlaneseq
    %v191 = vshrl.u32 %v190, 7
    %v192 = vsub.s32 0, %v191
    %v193 = vrot.slane %v146, %v192
    %v194 = vlaneseq
    %v195 = vshrl.u32 %v194, 7
    %v196 = vsub.s32 4, %v195
    %v197 = vrot.slane %v146, %v196
    %v198 = vlaneseq
    %v199 = vshrl.u32 %v198, 7
    %v200 = vsub.s32 0, %v199
    %v201 = vrot.slane %v147, %v200
    %v202 = vlaneseq
    %v203 = vshrl.u32 %v202, 7
    %v204 = vsub.s32 4, %v203
    %v205 = vrot.slane %v147, %v204
    %v206 = vlaneseq
    %v207 = vshrl.u32 %v206, 7
    %v208 = vsub.s32 0, %v207
    %v209 = vrot.slane %v148, %v208
    %v210 = vlaneseq
    %v211 = vshrl.u32 %v210, 7
    %v212 = vsub.s32 4, %v211
    %v213 = vrot.slane %v148, %v212
    %v214 = vlaneseq
    %v215 = vshrl.u32 %v214, 7
    %v216 = vsub.s32 0, %v215
    %v217 = vrot.slane %v149, %v216
    %v218 = vlaneseq
    %v219 = vshrl.u32 %v218, 7
    %v220 = vsub.s32 4, %v219
    %v221 = vrot.slane %v149, %v220
    %v238 = vlaneseq
    %v239 = vshrl.u32 %v238, 7
    %v240 = vsub.s32 0, %v239
    %v241 = vrot.slane %v161, %v240
    %v242 = vlaneseq
    %v243 = vshrl.u32 %v242, 7
    %v244 = vsub.s32 0, %v243
    %v245 = vrot.slane %v165, %v244
    %v246 = vlaneseq
    %v247 = vshrl.u32 %v246, 7
    %v248 = vsub.s32 0, %v247
    %v249 = vrot.slane %v169, %v248
    %v250 = vlaneseq
    %v251 = vshrl.u32 %v250, 7
    %v252 = vsub.s32 0, %v251
    %v253 = vrot.slane %v173, %v252
    %v254 = vlaneseq
    %v255 = vshrl.u32 %v254, 7
    %v256 = vsub.s32 0, %v255
    %v257 = vrot.slane %v177, %v256
    %v258 = vlaneseq
    %v259 = vshrl.u32 %v258, 7
    %v260 = vsub.s32 0, %v259
    %v261 = vrot.slane %v181, %v260
    %v262 = vlaneseq
    %v263 = vshrl.u32 %v262, 7
    %v264 = vsub.s32 0, %v263
    %v265 = vrot.slane %v185, %v264
    %v266 = vlaneseq
    %v267 = vshrl.u32 %v266, 7
    %v268 = vsub.s32 0, %v267
    %v269 = vrot.slane %v189, %v268
    %v270 = vlaneseq
    %v271 = vshrl.u32 %v270, 7
    %v272 = vsub.s32 0, %v271
    %v273 = vrot.slane %v193, %v272
    %v274 = vlaneseq
    %v275 = vshrl.u32 %v274, 7
    %v276 = vsub.s32 0, %v275
    %v277 = vrot.slane %v197, %v276
    %v278 = vlaneseq
    %v279 = vshrl.u32 %v278, 7
    %v280 = vsub.s32 0, %v279
    %v281 = vrot.slane %v201, %v280
    %v282 = vlaneseq
    %v283 = vshrl.u32 %v282, 7
    %v284 = vsub.s32 0, %v283
    %v285 = vrot.slane %v205, %v284
    %v286 = vlaneseq
    %v287 = vshrl.u32 %v286, 7
    %v288 = vsub.s32 0, %v287
    %v289 = vrot.slane %v209, %v288
    %v290 = vlaneseq
    %v291 = vshrl.u32 %v290, 7
    %v292 = vsub.s32 0, %v291
    %v293 = vrot.slane %v213, %v292
    %v294 = vlaneseq
    %v295 = vshrl.u32 %v294, 7
    %v296 = vsub.s32 0, %v295
    %v297 = vrot.slane %v217, %v296
    %v298 = vlaneseq
    %v299 = vshrl.u32 %v298, 7
    %v300 = vsub.s32 0, %v299
    %v301 = vrot.slane %v221, %v300
    %v318 = vcombine.low %v241, %v245
    %v319 = vcombine.low %v249, %v253
    %v320 = vcombine.low %v257, %v261
    %v321 = vcombine.low %v265, %v269
    %v322 = vcombine.low %v273, %v277
    %v323 = vcombine.low %v281, %v285
    %v324 = vcombine.low %v289, %v293
    %v325 = vcombine.low %v297, %v301
    %v334 = vsub.f32 %v36, %v318
    %v335 = vsub.f32 %v37, %v319
    %v336 = vsub.f32 %v38, %v320
    %v337 = vsub.f32 %v39, %v321
    %v338 = vsub.f32 %v40, %v322
    %v339 = vsub.f32 %v41, %v323
    %v340 = vsub.f32 %v42, %v324
    %v341 = vsub.f32 %v43, %v325
    %v342 = vmul.f32 %v334, 1.442695
    %v343 = vpow.pop %v342
    %v344 = vmul.f32 %v335, 1.442695
    %v345 = vpow.pop %v344
    %v346 = vmul.f32 %v336, 1.442695
    %v347 = vpow.pop %v346
    %v348 = vmul.f32 %v337, 1.442695
    %v349 = vpow.pop %v348
    %v350 = vmul.f32 %v338, 1.442695
    %v351 = vpow.pop %v350
    %v352 = vmul.f32 %v339, 1.442695
    %v353 = vpow.pop %v352
    %v354 = vmul.f32 %v340, 1.442695
    %v355 = vpow.pop %v354
    %v356 = vmul.f32 %v341, 1.442695
    %v357 = vpow.pop %v356
    %v366 = vrot.slane %v343, 5
    %v367 = vrot.slane %v366, 4
    %v368 = vrot.slane %v345, 5
    %v369 = vrot.slane %v368, 4
    %v370 = vrot.slane %v347, 5
    %v371 = vrot.slane %v370, 4
    %v372 = vrot.slane %v349, 5
    %v373 = vrot.slane %v372, 4
    %v374 = vrot.slane %v351, 5
    %v375 = vrot.slane %v374, 4
    %v376 = vrot.slane %v353, 5
    %v377 = vrot.slane %v376, 4
    %v378 = vrot.slane %v355, 5
    %v379 = vrot.slane %v378, 4
    %v380 = vrot.slane %v357, 5
    %v381 = vrot.slane %v380, 4
    %v390 = vadd.f32 %v343, %v367
    %v391 = vadd.f32 %v345, %v369
    %v392 = vadd.f32 %v347, %v371
    %v393 = vadd.f32 %v349, %v373
    %v394 = vadd.f32 %v351, %v375
    %v395 = vadd.f32 %v353, %v377
    %v396 = vadd.f32 %v355, %v379
    %v397 = vadd.f32 %v357, %v381
    %v398 = vrot.slane %v343, 6
    %v399 = vrot.slane %v398, 4
    %v400 = vrot.slane %v345, 6
    %v401 = vrot.slane %v400, 4
    %v402 = vrot.slane %v347, 6
    %v403 = vrot.slane %v402, 4
    %v404 = vrot.slane %v349, 6
    %v405 = vrot.slane %v404, 4
    %v406 = vrot.slane %v351, 6
    %v407 = vrot.slane %v406, 4
    %v408 = vrot.slane %v353, 6
    %v409 = vrot.slane %v408, 4
    %v410 = vrot.slane %v355, 6
    %v411 = vrot.slane %v410, 4
    %v412 = vrot.slane %v357, 6
    %v413 = vrot.slane %v412, 4
    %v422 = vadd.f32 %v390, %v399
    %v423 = vadd.f32 %v391, %v401
    %v424 = vadd.f32 %v392, %v403
    %v425 = vadd.f32 %v393, %v405
    %v426 = vadd.f32 %v394, %v407
    %v427 = vadd.f32 %v395, %v409
    %v428 = vadd.f32 %v396, %v411
    %v429 = vadd.f32 %v397, %v413
    %v430 = vrot.slane %v343, 7
    %v431 = vrot.slane %v430, 4
    %v432 = vrot.slane %v345, 7
    %v433 = vrot.slane %v432, 4
    %v434 = vrot.slane %v347, 7
    %v435 = vrot.slane %v434, 4
    %v436 = vrot.slane %v349, 7
    %v437 = vrot.slane %v436, 4
    %v438 = vrot.slane %v351, 7
    %v439 = vrot.slane %v438, 4
    %v440 = vrot.slane %v353, 7
    %v441 = vrot.slane %v440, 4
    %v442 = vrot.slane %v355, 7
    %v443 = vrot.slane %v442, 4
    %v444 = vrot.slane %v357, 7
    %v445 = vrot.slane %v444, 4
    %v454 = vadd.f32 %v422, %v431
    %v455 = vadd.f32 %v423, %v433
    %v456 = vadd.f32 %v424, %v435
    %v457 = vadd.f32 %v425, %v437
    %v458 = vadd.f32 %v426, %v439
    %v459 = vadd.f32 %v427, %v441
    %v460 = vadd.f32 %v428, %v443
    %v461 = vadd.f32 %v429, %v445
    %v462 = vrcp.pop %v454
    %v463 = vmul.f32 1.0, %v462
    %v464 = vrcp.pop %v455
    %v465 = vmul.f32 1.0, %v464
    %v466 = vrcp.pop %v456
    %v467 = vmul.f32 1.0, %v466
    %v468 = vrcp.pop %v457
    %v469 = vmul.f32 1.0, %v468
    %v470 = vrcp.pop %v458
    %v471 = vmul.f32 1.0, %v470
    %v472 = vrcp.pop %v459
    %v473 = vmul.f32 1.0, %v472
    %v474 = vrcp.pop %v460
    %v475 = vmul.f32 1.0, %v474
    %v476 = vrcp.pop %v461
    %v477 = vmul.f32 1.0, %v476
    %v486 = vlaneseq
    %v487 = vshrl.u32 %v486, 7
    %v488 = vsub.s32 0, %v487
    %v489 = vrot.slane %v463, %v488
    %v490 = vlaneseq
    %v491 = vshrl.u32 %v490, 7
    %v492 = vsub.s32 4, %v491
    %v493 = vrot.slane %v463, %v492
    %v494 = vlaneseq
    %v495 = vshrl.u32 %v494, 7
    %v496 = vsub.s32 0, %v495
    %v497 = vrot.slane %v465, %v496
    %v498 = vlaneseq
    %v499 = vshrl.u32 %v498, 7
    %v500 = vsub.s32 4, %v499
    %v501 = vrot.slane %v465, %v500
    %v502 = vlaneseq
    %v503 = vshrl.u32 %v502, 7
    %v504 = vsub.s32 0, %v503
    %v505 = vrot.slane %v467, %v504
    %v506 = vlaneseq
    %v507 = vshrl.u32 %v506, 7
    %v508 = vsub.s32 4, %v507
    %v509 = vrot.slane %v467, %v508
    %v510 = vlaneseq
    %v511 = vshrl.u32 %v510, 7
    %v512 = vsub.s32 0, %v511
    %v513 = vrot.slane %v469, %v512
    %v514 = vlaneseq
    %v515 = vshrl.u32 %v514, 7
    %v516 = vsub.s32 4, %v515
    %v517 = vrot.slane %v469, %v516
    %v518 = vlaneseq
    %v519 = vshrl.u32 %v518, 7
    %v520 = vsub.s32 0, %v519
    %v521 = vrot.slane %v471, %v520
    %v522 = vlaneseq
    %v523 = vshrl.u32 %v522, 7
    %v524 = vsub.s32 4, %v523
    %v525 = vrot.slane %v471, %v524
    %v526 = vlaneseq
    %v527 = vshrl.u32 %v526, 7
    %v528 = vsub.s32 0, %v527
    %v529 = vrot.slane %v473, %v528
    %v530 = vlaneseq
    %v531 = vshrl.u32 %v530, 7
    %v532 = vsub.s32 4, %v531
    %v533 = vrot.slane %v473, %v532
    %v534 = vlaneseq
    %v535 = vshrl.u32 %v534, 7
    %v536 = vsub.s32 0, %v535
    %v537 = vrot.slane %v475, %v536
    %v538 = vlaneseq
    %v539 = vshrl.u32 %v538, 7
    %v540 = vsub.s32 4, %v539
    %v541 = vrot.slane %v475, %v540
    %v542 = vlaneseq
    %v543 = vshrl.u32 %v542, 7
    %v544 = vsub.s32 0, %v543
    %v545 = vrot.slane %v477, %v544
    %v546 = vlaneseq
    %v547 = vshrl.u32 %v546, 7
    %v548 = vsub.s32 4, %v547
    %v549 = vrot.slane %v477, %v548
    %v566 = vlaneseq
    %v567 = vshrl.u32 %v566, 7
    %v568 = vsub.s32 0, %v567
    %v569 = vrot.slane %v489, %v568
    %v570 = vlaneseq
    %v571 = vshrl.u32 %v570, 7
    %v572 = vsub.s32 0, %v571
    %v573 = vrot.slane %v493, %v572
    %v574 = vlaneseq
    %v575 = vshrl.u32 %v574, 7
    %v576 = vsub.s32 0, %v575
    %v577 = vrot.slane %v497, %v576
    %v578 = vlaneseq
    %v579 = vshrl.u32 %v578, 7
    %v580 = vsub.s32 0, %v579
    %v581 = vrot.slane %v501, %v580
    %v582 = vlaneseq
    %v583 = vshrl.u32 %v582, 7
    %v584 = vsub.s32 0, %v583
    %v585 = vrot.slane %v505, %v584
    %v586 = vlaneseq
    %v587 = vshrl.u32 %v586, 7
    %v588 = vsub.s32 0, %v587
    %v589 = vrot.slane %v509, %v588
    %v590 = vlaneseq
    %v591 = vshrl.u32 %v590, 7
    %v592 = vsub.s32 0, %v591
    %v593 = vrot.slane %v513, %v592
    %v594 = vlaneseq
    %v595 = vshrl.u32 %v594, 7
    %v596 = vsub.s32 0, %v595
    %v597 = vrot.slane %v517, %v596
    %v598 = vlaneseq
    %v599 = vshrl.u32 %v598, 7
    %v600 = vsub.s32 0, %v599
    %v601 = vrot.slane %v521, %v600
    %v602 = vlaneseq
    %v603 = vshrl.u32 %v602, 7
    %v604 = vsub.s32 0, %v603
    %v605 = vrot.slane %v525, %v604
    %v606 = vlaneseq
    %v607 = vshrl.u32 %v606, 7
    %v608 = vsub.s32 0, %v607
    %v609 = vrot.slane %v529, %v608
    %v610 = vlaneseq
    %v611 = vshrl.u32 %v610, 7
    %v612 = vsub.s32 0, %v611
    %v613 = vrot.slane %v533, %v612
    %v614 = vlaneseq
    %v615 = vshrl.u32 %v614, 7
    %v616 = vsub.s32 0, %v615
    %v617 = vrot.slane %v537, %v616
    %v618 = vlaneseq
    %v619 = vshrl.u32 %v618, 7
    %v620 = vsub.s32 0, %v619
    %v621 = vrot.slane %v541, %v620
    %v622 = vlaneseq
    %v623 = vshrl.u32 %v622, 7
    %v624 = vsub.s32 0, %v623
    %v625 = vrot.slane %v545, %v624
    %v626 = vlaneseq
    %v627 = vshrl.u32 %v626, 7
    %v628 = vsub.s32 0, %v627
    %v629 = vrot.slane %v549, %v628
    %v646 = vcombine.low %v569, %v573
    %v647 = vcombine.low %v577, %v581
    %v648 = vcombine.low %v585, %v589
    %v649 = vcombine.low %v593, %v597
    %v650 = vcombine.low %v601, %v605
    %v651 = vcombine.low %v609, %v613
    %v652 = vcombine.low %v617, %v621
    %v653 = vcombine.low %v625, %v629
    %v662 = vmul.f32 %v343, %v646
    %v663 = vmul.f32 %v345, %v647
    %v664 = vmul.f32 %v347, %v648
    %v665 = vmul.f32 %v349, %v649
    %v666 = vmul.f32 %v351, %v650
    %v667 = vmul.f32 %v353, %v651
    %v668 = vmul.f32 %v355, %v652
    %v669 = vmul.f32 %v357, %v653
    %vm670 = vcmp.ne.s32.totalorder %v44, 4294967295
    %vm671 = vcmp.ne.s32.totalorder %v45, 4294967295
    %v672 = vlaneseq
    %v673 = vshrl.u32 %v672, 7
    %v674 = vlaneseq
    %v675 = vshrl.u32 %v674, 7
    %v676 = vsub.s32 0, %v675
    %v677 = vrot.slane %v44, %v676
    %v678 = vlaneseq
    %v679 = vshrl.u32 %v678, 7
    %v680 = vsub.s32 1, %v679
    %v681 = vrot.slane %v44, %v680
    %v682 = vlaneseq
    %v683 = vshrl.u32 %v682, 7
    %v684 = vsub.s32 2, %v683
    %v685 = vrot.slane %v44, %v684
    %v686 = vlaneseq
    %v687 = vshrl.u32 %v686, 7
    %v688 = vsub.s32 3, %v687
    %v689 = vrot.slane %v44, %v688
    %v690 = vlaneseq
    %v691 = vshrl.u32 %v690, 7
    %v692 = vsub.s32 4, %v691
    %v693 = vrot.slane %v44, %v692
    %v694 = vlaneseq
    %v695 = vshrl.u32 %v694, 7
    %v696 = vsub.s32 5, %v695
    %v697 = vrot.slane %v44, %v696
    %v698 = vlaneseq
    %v699 = vshrl.u32 %v698, 7
    %v700 = vsub.s32 6, %v699
    %v701 = vrot.slane %v44, %v700
    %v702 = vlaneseq
    %v703 = vshrl.u32 %v702, 7
    %v704 = vsub.s32 7, %v703
    %v705 = vrot.slane %v44, %v704
    %v706 = vlaneseq
    %v707 = vshrl.u32 %v706, 7
    %v708 = vsub.s32 0, %v707
    %v709 = vrot.slane %v45, %v708
    %v710 = vlaneseq
    %v711 = vshrl.u32 %v710, 7
    %v712 = vsub.s32 1, %v711
    %v713 = vrot.slane %v45, %v712
    %v714 = vlaneseq
    %v715 = vshrl.u32 %v714, 7
    %v716 = vsub.s32 2, %v715
    %v717 = vrot.slane %v45, %v716
    %v718 = vlaneseq
    %v719 = vshrl.u32 %v718, 7
    %v720 = vsub.s32 3, %v719
    %v721 = vrot.slane %v45, %v720
    %v722 = vlaneseq
    %v723 = vshrl.u32 %v722, 7
    %v724 = vsub.s32 4, %v723
    %v725 = vrot.slane %v45, %v724
    %v726 = vlaneseq
    %v727 = vshrl.u32 %v726, 7
    %v728 = vsub.s32 5, %v727
    %v729 = vrot.slane %v45, %v728
    %v730 = vlaneseq
    %v731 = vshrl.u32 %v730, 7
    %v732 = vsub.s32 6, %v731
    %v733 = vrot.slane %v45, %v732
    %v734 = vlaneseq
    %v735 = vshrl.u32 %v734, 7
    %v736 = vsub.s32 7, %v735
    %v737 = vrot.slane %v45, %v736
    %vm738 = vcmp.eq.s32.totalorder %v673, %v677
    %vm739 = vcmp.eq.s32.totalorder %v673, %v681
    %vm740 = vcmp.eq.s32.totalorder %v673, %v685
    %vm741 = vcmp.eq.s32.totalorder %v673, %v689
    %vm742 = vcmp.eq.s32.totalorder %v673, %v693
    %vm743 = vcmp.eq.s32.totalorder %v673, %v697
    %vm744 = vcmp.eq.s32.totalorder %v673, %v701
    %vm745 = vcmp.eq.s32.totalorder %v673, %v705
    %vm746 = vcmp.eq.s32.totalorder %v673, %v709
    %vm747 = vcmp.eq.s32.totalorder %v673, %v713
    %vm748 = vcmp.eq.s32.totalorder %v673, %v717
    %vm749 = vcmp.eq.s32.totalorder %v673, %v721
    %vm750 = vcmp.eq.s32.totalorder %v673, %v725
    %vm751 = vcmp.eq.s32.totalorder %v673, %v729
    %vm752 = vcmp.eq.s32.totalorder %v673, %v733
    %vm753 = vcmp.eq.s32.totalorder %v673, %v737
    %v754 = vsel %vm738, 1, 0
    %v755 = vsel %vm739, 1, 0
    %v756 = vsel %vm740, 1, 0
    %v757 = vsel %vm741, 1, 0
    %v758 = vsel %vm742, 1, 0
    %v759 = vsel %vm743, 1, 0
    %v760 = vsel %vm744, 1, 0
    %v761 = vsel %vm745, 1, 0
    %v762 = vsel %vm746, 1, 0
    %v763 = vsel %vm747, 1, 0
    %v764 = vsel %vm748, 1, 0
    %v765 = vsel %vm749, 1, 0
    %v766 = vsel %vm750, 1, 0
    %v767 = vsel %vm751, 1, 0
    %v768 = vsel %vm752, 1, 0
    %v769 = vsel %vm753, 1, 0
    %v770 = vcvt.s32.f32 %v754
    %v771 = vcvt.s32.f32 %v755
    %v772 = vcvt.s32.f32 %v756
    %v773 = vcvt.s32.f32 %v757
    %v774 = vcvt.s32.f32 %v758
    %v775 = vcvt.s32.f32 %v759
    %v776 = vcvt.s32.f32 %v760
    %v777 = vcvt.s32.f32 %v761
    %v778 = vcvt.s32.f32 %v762
    %v779 = vcvt.s32.f32 %v763
    %v780 = vcvt.s32.f32 %v764
    %v781 = vcvt.s32.f32 %v765
    %v782 = vcvt.s32.f32 %v766
    %v783 = vcvt.s32.f32 %v767
    %v784 = vcvt.s32.f32 %v768
    %v785 = vcvt.s32.f32 %v769
    %v794 = vcombine.high %v662, %v662
    %v795 = vcombine.high %v663, %v663
    %v796 = vcombine.high %v664, %v664
    %v797 = vcombine.high %v665, %v665
    %v798 = vcombine.high %v666, %v666
    %v799 = vcombine.high %v667, %v667
    %v800 = vcombine.high %v668, %v668
    %v801 = vcombine.high %v669, %v669
    %v810 = vsub.f32 %v770, %v662
    %v811 = vsub.f32 %v771, %v794
    %v812 = vsub.f32 %v772, %v663
    %v813 = vsub.f32 %v773, %v795
    %v814 = vsub.f32 %v774, %v664
    %v815 = vsub.f32 %v775, %v796
    %v816 = vsub.f32 %v776, %v665
    %v817 = vsub.f32 %v777, %v797
    %v818 = vsub.f32 %v778, %v666
    %v819 = vsub.f32 %v779, %v798
    %v820 = vsub.f32 %v780, %v667
    %v821 = vsub.f32 %v781, %v799
    %v822 = vsub.f32 %v782, %v668
    %v823 = vsub.f32 %v783, %v800
    %v824 = vsub.f32 %v784, %v669
    %v825 = vsub.f32 %v785, %v801
    %v826 = vand.u32 2147483647, %v810
    %v827 = vand.u32 2147483647, %v811
    %v828 = vand.u32 2147483647, %v812
    %v829 = vand.u32 2147483647, %v813
    %v830 = vand.u32 2147483647, %v814
    %v831 = vand.u32 2147483647, %v815
    %v832 = vand.u32 2147483647, %v816
    %v833 = vand.u32 2147483647, %v817
    %v834 = vand.u32 2147483647, %v818
    %v835 = vand.u32 2147483647, %v819
    %v836 = vand.u32 2147483647, %v820
    %v837 = vand.u32 2147483647, %v821
    %v838 = vand.u32 2147483647, %v822
    %v839 = vand.u32 2147483647, %v823
    %v840 = vand.u32 2147483647, %v824
    %v841 = vand.u32 2147483647, %v825
    %v842 = vsel %vm670, 1, 0
    %v843 = vsel %vm671, 1, 0
    %v844 = vlaneseq
    %v845 = vshrl.u32 %v844, 7
    %v846 = vsub.s32 0, %v845
    %v847 = vrot.slane %v842, %v846
    %v848 = vlaneseq
    %v849 = vshrl.u32 %v848, 7
    %v850 = vsub.s32 1, %v849
    %v851 = vrot.slane %v842, %v850
    %v852 = vlaneseq
    %v853 = vshrl.u32 %v852, 7
    %v854 = vsub.s32 2, %v853
    %v855 = vrot.slane %v842, %v854
    %v856 = vlaneseq
    %v857 = vshrl.u32 %v856, 7
    %v858 = vsub.s32 3, %v857
    %v859 = vrot.slane %v842, %v858
    %v860 = vlaneseq
    %v861 = vshrl.u32 %v860, 7
    %v862 = vsub.s32 4, %v861
    %v863 = vrot.slane %v842, %v862
    %v864 = vlaneseq
    %v865 = vshrl.u32 %v864, 7
    %v866 = vsub.s32 5, %v865
    %v867 = vrot.slane %v842, %v866
    %v868 = vlaneseq
    %v869 = vshrl.u32 %v868, 7
    %v870 = vsub.s32 6, %v869
    %v871 = vrot.slane %v842, %v870
    %v872 = vlaneseq
    %v873 = vshrl.u32 %v872, 7
    %v874 = vsub.s32 7, %v873
    %v875 = vrot.slane %v842, %v874
    %v876 = vlaneseq
    %v877 = vshrl.u32 %v876, 7
    %v878 = vsub.s32 0, %v877
    %v879 = vrot.slane %v843, %v878
    %v880 = vlaneseq
    %v881 = vshrl.u32 %v880, 7
    %v882 = vsub.s32 1, %v881
    %v883 = vrot.slane %v843, %v882
    %v884 = vlaneseq
    %v885 = vshrl.u32 %v884, 7
    %v886 = vsub.s32 2, %v885
    %v887 = vrot.slane %v843, %v886
    %v888 = vlaneseq
    %v889 = vshrl.u32 %v888, 7
    %v890 = vsub.s32 3, %v889
    %v891 = vrot.slane %v843, %v890
    %v892 = vlaneseq
    %v893 = vshrl.u32 %v892, 7
    %v894 = vsub.s32 4, %v893
    %v895 = vrot.slane %v843, %v894
    %v896 = vlaneseq
    %v897 = vshrl.u32 %v896, 7
    %v898 = vsub.s32 5, %v897
    %v899 = vrot.slane %v843, %v898
    %v900 = vlaneseq
    %v901 = vshrl.u32 %v900, 7
    %v902 = vsub.s32 6, %v901
    %v903 = vrot.slane %v843, %v902
    %v904 = vlaneseq
    %v905 = vshrl.u32 %v904, 7
    %v906 = vsub.s32 7, %v905
    %v907 = vrot.slane %v843, %v906
    %vm908 = vcmp.eq.s32.totalorder %v847, 1
    %vm909 = vcmp.eq.s32.totalorder %v851, 1
    %vm910 = vcmp.eq.s32.totalorder %v855, 1
    %vm911 = vcmp.eq.s32.totalorder %v859, 1
    %vm912 = vcmp.eq.s32.totalorder %v863, 1
    %vm913 = vcmp.eq.s32.totalorder %v867, 1
    %vm914 = vcmp.eq.s32.totalorder %v871, 1
    %vm915 = vcmp.eq.s32.totalorder %v875, 1
    %vm916 = vcmp.eq.s32.totalorder %v879, 1
    %vm917 = vcmp.eq.s32.totalorder %v883, 1
    %vm918 = vcmp.eq.s32.totalorder %v887, 1
    %vm919 = vcmp.eq.s32.totalorder %v891, 1
    %vm920 = vcmp.eq.s32.totalorder %v895, 1
    %vm921 = vcmp.eq.s32.totalorder %v899, 1
    %vm922 = vcmp.eq.s32.totalorder %v903, 1
    %vm923 = vcmp.eq.s32.totalorder %v907, 1
    %v924 = vsel %vm908, %v826, -1.0
    %v925 = vsel %vm909, %v827, -1.0
    %v926 = vsel %vm910, %v828, -1.0
    %v927 = vsel %vm911, %v829, -1.0
    %v928 = vsel %vm912, %v830, -1.0
    %v929 = vsel %vm913, %v831, -1.0
    %v930 = vsel %vm914, %v832, -1.0
    %v931 = vsel %vm915, %v833, -1.0
    %v932 = vsel %vm916, %v834, -1.0
    %v933 = vsel %vm917, %v835, -1.0
    %v934 = vsel %vm918, %v836, -1.0
    %v935 = vsel %vm919, %v837, -1.0
    %v936 = vsel %vm920, %v838, -1.0
    %v937 = vsel %vm921, %v839, -1.0
    %v938 = vsel %vm922, %v840, -1.0
    %v939 = vsel %vm923, %v841, -1.0
    %v956 = vcombine.low %v924, %v925
    %v957 = vcombine.low %v926, %v927
    %v958 = vcombine.low %v928, %v929
    %v959 = vcombine.low %v930, %v931
    %v960 = vcombine.low %v932, %v933
    %v961 = vcombine.low %v934, %v935
    %v962 = vcombine.low %v936, %v937
    %v963 = vcombine.low %v938, %v939
    %972 = vst [vmem:[#allocation7] sm:$0xff] %v956
    %973 = vst [vmem:[#allocation7 + $0x8] sm:$0xff] %v957
    %974 = vst [vmem:[#allocation7 + $0x10] sm:$0xff] %v958
    %975 = vst [vmem:[#allocation7 + $0x18] sm:$0xff] %v959
    %976 = vst [vmem:[#allocation7 + $0x20] sm:$0xff] %v960
    %977 = vst [vmem:[#allocation7 + $0x28] sm:$0xff] %v961
    %978 = vst [vmem:[#allocation7 + $0x30] sm:$0xff] %v962
    %979 = vst [vmem:[#allocation7 + $0x38] sm:$0xff] %v963
    // Predicated region
    $region18: #{tpu_custom_call.1} parent=1 // pred_check
      _
    $region19: #{tpu_custom_call.1} parent=1 // pred_check_branch
      %981 = sbr.rel (0) target = $region21
    $region20: #{tpu_custom_call.1} parent=1 // pred_region
      %s983 = ssub.s32 1024, 1024
      %984 = vsyncadd [#allocation4], %s983
      %s986 = sshll.u32 [#allocation7], 4
      %s987 = int_to_ptr.vmem [resolvable:$true] %s986
      %989 = dma.vmem_to_hbm [thread:$0]  %s987, 1024, %s2, [#allocation4]
    $region21: #{tpu_custom_call.1} parent=1 // pred_fallthru
      _
    // Predicated region
    $region22: #{tpu_custom_call.1} parent=1 // pred_check
      _
    $region23: #{tpu_custom_call.1} parent=1 // pred_check_branch
      %991 = sbr.rel (0) target = $region25
    $region24: #{tpu_custom_call.1} parent=1 // pred_region
      %992 = dma.done [#allocation4], 1024
    $region25: #{tpu_custom_call.1} parent=1 // pred_fallthru
      _
    %993 = vsyncpa [#allocation3], 1
    %994 = vsyncpa [#allocation6], 1
    %995 = vsyncpa [#allocation4], 1

</llo_original>
